<compile_context>
chip_gen: v6e
topology: v6e:2x2x1
jax: 0.10.0
libtpu: 0.0.40
codegen_flags: <defaults>
</compile_context>

<pallas_src>
import functools

import jax
import jax.numpy as jnp
from jax import lax
from jax.experimental import pallas as pl
from jax.experimental.pallas import tpu as pltpu

DATA_DIM = 2
NUM_MODES = 6
PRED_LEN = 30
OUT_DIM = PRED_LEN * DATA_DIM          # 60
NUM_HEADS = NUM_MODES + 1              # 6 trajectory heads + 1 confidence head
CONF_OFF = NUM_MODES * OUT_DIM         # 360: confidence logits start here
OUT_TOTAL = 384                        # lane-dense output slab (3 * 128)
BN_EPS = 1e-5
SUBLANE = 8
LANE = 128


def _round_up(x, m):
    return ((x + m - 1) // m) * m


# ----------------------------------------------------------------------------
# Kernel: whole decoder in one grid step.
# ----------------------------------------------------------------------------
def decoder_kernel(x_ref, w1_ref, w2_ref, w3_ref, wf_ref, vec_ref,
                   out_ref, *, n_valid):
    x = x_ref[...]                                  # (Bp, H)
    vecs = vec_ref[...]                             # (10, OUT_TOTAL)
    hf = w1_ref.shape[1]                            # padded fused hidden width
    hdim = x.shape[1]                               # per-head hidden width H
    bp = x.shape[0]

    # packed per-head vectors (only the first hf lanes are meaningful)
    b1, g1, be1 = vecs[0:1, :hf], vecs[1:2, :hf], vecs[2:3, :hf]
    b2, g2, be2 = vecs[3:4, :hf], vecs[4:5, :hf], vecs[5:6, :hf]
    b3, g3, be3 = vecs[6:7, :hf], vecs[7:8, :hf], vecs[8:9, :hf]
    bf = vecs[9:10, :]                              # (1, OUT_TOTAL)

    inv_n = jnp.float32(1.0 / n_valid)
    need_mask = (n_valid != bp)                     # trace-time specialization
    if need_mask:
        valid = (lax.broadcasted_iota(jnp.int32, (bp, 1), 0)
                 < n_valid).astype(jnp.float32)

    def bn(h, gamma, beta):
        # BatchNorm1d, training mode, one-pass batch statistics over valid rows.
        hm = h * valid if need_mask else h
        s1 = jnp.sum(hm, axis=0, keepdims=True)
        s2 = jnp.sum(hm * h, axis=0, keepdims=True)
        mean = s1 * inv_n
        var = s2 * inv_n - mean * mean
        return (h - mean) * lax.rsqrt(var + BN_EPS) * gamma + beta

    # LinearRes (all 7 heads fused along the feature axis).
    h = jnp.dot(x, w1_ref[...], preferred_element_type=jnp.float32) + b1
    h = jnp.maximum(bn(h, g1, be1), 0.0)
    h = jnp.dot(h, w2_ref[...], preferred_element_type=jnp.float32) + b2
    h = jnp.maximum(bn(h, g2, be2), 0.0)
    h = jnp.dot(h, w3_ref[...], preferred_element_type=jnp.float32) + b3
    h = bn(h, g3, be3)

    # Residual: replicate x across the 7 head slots (zero-fill the padded slot).
    pad = hf - NUM_HEADS * hdim
    parts = [x] * NUM_HEADS
    if pad > 0:
        parts.append(jnp.zeros((bp, pad), x.dtype))
    x_rep = jnp.concatenate(parts, axis=1)          # (Bp, HF)
    h = jnp.maximum(h + x_rep, 0.0)

    # Final linears of all heads -> one lane-dense (Bp, OUT_TOTAL) slab.
    y = jnp.dot(h, wf_ref[...], preferred_element_type=jnp.float32) + bf

    # Softmax restricted to the last 128-lane tile (conf logits live at
    # columns [CONF_OFF, CONF_OFF+6) = [360, 366), i.e. inside [256, 384)).
    tail_off = OUT_TOTAL - LANE                     # 256 (lane-aligned)
    tail = y[:, tail_off:]                          # (Bp, 128)
    col = lax.broadcasted_iota(jnp.int32, tail.shape, 1)
    cmask = (col >= CONF_OFF - tail_off) & (col < CONF_OFF - tail_off + NUM_MODES)
    logits = jnp.where(cmask, tail, -jnp.inf)
    m = jnp.max(logits, axis=1, keepdims=True)      # finite (conf logits finite)
    e = jnp.exp(logits - m)                         # masked lanes: exp(-inf)=0
    sm = e / jnp.sum(e, axis=1, keepdims=True)
    tail_out = jnp.where(cmask, sm, tail)

    out_ref[:, 0:tail_off] = y[:, 0:tail_off]
    out_ref[:, tail_off:] = tail_out


# ----------------------------------------------------------------------------
# Parameter fusion (one-time preprocessing of per-head PyTorch-style params).
# ----------------------------------------------------------------------------
def fuse_params(params):
    """Per-head params -> fused, lane-padded layout used by the kernel."""
    (w1, b1, g1, be1, w2, b2, g2, be2, w3, b3, g3, be3,
     wf_pred, bf_pred, wf_conf, bf_conf) = params
    H = w1.shape[1]
    HF_used = NUM_HEADS * H                        # 224
    HF = _round_up(HF_used, LANE)                  # 256

    # W1: dense horizontal stack (H, HF); x @ W1 == x_rep @ blockdiag(w1).
    W1 = jnp.zeros((H, HF), jnp.float32)
    for h in range(NUM_HEADS):
        W1 = W1.at[:, h * H:(h + 1) * H].set(w1[h])

    def block_diag(blocks):
        out = jnp.zeros((HF, HF), jnp.float32)
        for i, b in enumerate(blocks):
            out = out.at[i * H:(i + 1) * H, i * H:(i + 1) * H].set(b)
        return out

    W2 = block_diag([w2[h] for h in range(NUM_HEADS)])
    W3 = block_diag([w3[h] for h in range(NUM_HEADS)])

    WF = jnp.zeros((HF, OUT_TOTAL), jnp.float32)
    for h in range(NUM_MODES):
        WF = WF.at[h * H:(h + 1) * H, h * OUT_DIM:(h + 1) * OUT_DIM].set(wf_pred[h])
    WF = WF.at[NUM_MODES * H:HF_used, CONF_OFF:CONF_OFF + NUM_MODES].set(wf_conf)

    # vecs (10, OUT_TOTAL): rows 0-8 = b1,g1,be1,b2,g2,be2,b3,g3,be3 (width
    # HF_used, zero-padded); row 9 = final bias bf (width OUT_TOTAL).
    def packv(v):
        return jnp.pad(v.reshape(HF_used), (0, OUT_TOTAL - HF_used))

    bf = jnp.zeros((OUT_TOTAL,), jnp.float32)
    for h in range(NUM_MODES):
        bf = bf.at[h * OUT_DIM:(h + 1) * OUT_DIM].set(bf_pred[h])
    bf = bf.at[CONF_OFF:CONF_OFF + NUM_MODES].set(bf_conf)

    vecs = jnp.stack([packv(b1), packv(g1), packv(be1),
                      packv(b2), packv(g2), packv(be2),
                      packv(b3), packv(g3), packv(be3),
                      bf], axis=0)
    return W1, W2, W3, WF, vecs


# ----------------------------------------------------------------------------
# Wrapper
# ----------------------------------------------------------------------------
@jax.jit
def multimodal_decoder_pallas(latent_space, fused_params):
    """latent_space: (B, H) f32 -> (pred_traj_fake_rel (B,6,30,2), conf (B,6))."""
    B, H = latent_space.shape
    W1, W2, W3, WF, vecs = fused_params
    HF = W1.shape[1]

    Bp = _round_up(B, SUBLANE)
    x = latent_space if Bp == B else jnp.pad(latent_space, ((0, Bp - B), (0, 0)))

    full = lambda shape: pl.BlockSpec(shape, lambda i: (0,) * len(shape))
    out = pl.pallas_call(
        functools.partial(decoder_kernel, n_valid=B),
        out_shape=jax.ShapeDtypeStruct((Bp, OUT_TOTAL), jnp.float32),
        grid=(1,),
        in_specs=[full((Bp, H)),
                  full((H, HF)), full((HF, HF)), full((HF, HF)),
                  full((HF, OUT_TOTAL)),
                  full((10, OUT_TOTAL))],
        out_specs=full((Bp, OUT_TOTAL)),
        compiler_params=pltpu.CompilerParams(
            dimension_semantics=("arbitrary",)),
    )(x, W1, W2, W3, WF, vecs)

    out = out[:B]
    # columns [0:360] are head-major (head, t, d) -> directly (B, 6, 30, 2)
    pred_traj_fake_rel = out[:, :CONF_OFF].reshape(B, NUM_MODES, PRED_LEN, DATA_DIM)
    conf = out[:, CONF_OFF:CONF_OFF + NUM_MODES]
    return pred_traj_fake_rel, conf


# ----------------------------------------------------------------------------
# Synthetic per-head parameters (PyTorch module layout, weights pre-transposed
# to (in, out)) and a pure-JAX reference forward.
# ----------------------------------------------------------------------------
def init_params(key, H):
    ks = jax.random.split(key, 16)
    s = 1.0 / jnp.sqrt(H)
    u = lambda k, shape: jax.random.uniform(k, shape, jnp.float32, -s, s)
    w1 = u(ks[0], (NUM_HEADS, H, H)); b1 = u(ks[1], (NUM_HEADS, H))
    w2 = u(ks[2], (NUM_HEADS, H, H)); b2 = u(ks[3], (NUM_HEADS, H))
    w3 = u(ks[4], (NUM_HEADS, H, H)); b3 = u(ks[5], (NUM_HEADS, H))
    g1 = 1.0 + 0.1 * jax.random.normal(ks[6], (NUM_HEADS, H), jnp.float32)
    be1 = 0.1 * jax.random.normal(ks[7], (NUM_HEADS, H), jnp.float32)
    g2 = 1.0 + 0.1 * jax.random.normal(ks[8], (NUM_HEADS, H), jnp.float32)
    be2 = 0.1 * jax.random.normal(ks[9], (NUM_HEADS, H), jnp.float32)
    g3 = 1.0 + 0.1 * jax.random.normal(ks[10], (NUM_HEADS, H), jnp.float32)
    be3 = 0.1 * jax.random.normal(ks[11], (NUM_HEADS, H), jnp.float32)
    wf_pred = u(ks[12], (NUM_MODES, H, OUT_DIM)); bf_pred = u(ks[13], (NUM_MODES, OUT_DIM))
    wf_conf = u(ks[14], (H, NUM_MODES)); bf_conf = u(ks[15], (NUM_MODES,))
    return (w1, b1, g1, be1, w2, b2, g2, be2, w3, b3, g3, be3,
            wf_pred, bf_pred, wf_conf, bf_conf)


def reference_forward(x, params):
    """Pure-JAX mirror of the PyTorch forward (BatchNorm1d in training mode)."""
    (w1, b1, g1, be1, w2, b2, g2, be2, w3, b3, g3, be3,
     wf_pred, bf_pred, wf_conf, bf_conf) = params
    B = x.shape[0]

    def bn(h, gamma, beta):
        mean = jnp.mean(h, axis=0, keepdims=True)
        var = jnp.mean((h - mean) ** 2, axis=0, keepdims=True)
        return (h - mean) * lax.rsqrt(var + BN_EPS) * gamma + beta

    def linear_res(xh, h):
        t = xh @ w1[h] + b1[h]
        t = jnp.maximum(bn(t, g1[h], be1[h]), 0.0)
        t = t @ w2[h] + b2[h]
        t = jnp.maximum(bn(t, g2[h], be2[h]), 0.0)
        t = t @ w3[h] + b3[h]
        t = bn(t, g3[h], be3[h])
        return jnp.maximum(t + xh, 0.0)

    preds = []
    for m in range(NUM_MODES):
        t = linear_res(x, m)
        preds.append((t @ wf_pred[m] + bf_pred[m]).reshape(B, PRED_LEN, DATA_DIM))
    pred = jnp.stack(preds, axis=0).transpose(1, 0, 2, 3)        # (B, 6, 30, 2)
    t = linear_res(x, NUM_MODES)
    conf = jax.nn.softmax(t @ wf_conf + bf_conf, axis=1)         # (B, 6)
    return pred, conf


if __name__ == "__main__":
    B = 4                 # batch (>1 required for training-mode BatchNorm)
    H = 32                # decoder_h_dim

    key = jax.random.PRNGKey(0)
    k_x, k_p = jax.random.split(key)
    latent_space = jax.random.normal(k_x, (B, H), jnp.float32)
    params = init_params(k_p, H)
    fused = fuse_params(params)

    pred, conf = multimodal_decoder_pallas(latent_space, fused)
    pred, conf = jax.block_until_ready((pred, conf))

    pred_ref, conf_ref = reference_forward(latent_space, params)
    assert pred.shape == (B, NUM_MODES, PRED_LEN, DATA_DIM)
    assert conf.shape == (B, NUM_MODES)
    assert jnp.allclose(pred, pred_ref, atol=1e-4, rtol=1e-4)
    assert jnp.allclose(conf, conf_ref, atol=1e-5, rtol=1e-5)
    assert jnp.allclose(jnp.sum(conf, axis=1), jnp.ones((B,)), atol=1e-5)

    print("KERNEL_OK")
</pallas_src>

<mosaic_0001>
module attributes {stable_mosaic.version = 11 : i64} {
  func.func @decoder_kernel(%arg0: i32, %arg1: memref<8x32xf32, #tpu.memory_space<vmem>>, %arg2: memref<32x256xf32, #tpu.memory_space<vmem>>, %arg3: memref<256x256xf32, #tpu.memory_space<vmem>>, %arg4: memref<256x256xf32, #tpu.memory_space<vmem>>, %arg5: memref<256x384xf32, #tpu.memory_space<vmem>>, %arg6: memref<10x384xf32, #tpu.memory_space<vmem>>, %arg7: memref<8x384xf32, #tpu.memory_space<vmem>>) attributes {dimension_semantics = [#tpu.dimension_semantics<arbitrary>], iteration_bounds = array<i64: 1>, scalar_prefetch = 0 : i64, scratch_operands = 0 : i64, tpu.core_type = #tpu.core_type<tc>, window_params = [{pipeline_mode = #tpu.pipeline_mode<synchronous>, transform_indices = @transform_0, window_bounds = array<i64: 8, 32>}, {pipeline_mode = #tpu.pipeline_mode<synchronous>, transform_indices = @transform_1, window_bounds = array<i64: 32, 256>}, {pipeline_mode = #tpu.pipeline_mode<synchronous>, transform_indices = @transform_2, window_bounds = array<i64: 256, 256>}, {pipeline_mode = #tpu.pipeline_mode<synchronous>, transform_indices = @transform_3, window_bounds = array<i64: 256, 256>}, {pipeline_mode = #tpu.pipeline_mode<synchronous>, transform_indices = @transform_4, window_bounds = array<i64: 256, 384>}, {pipeline_mode = #tpu.pipeline_mode<synchronous>, transform_indices = @transform_5, window_bounds = array<i64: 10, 384>}, {pipeline_mode = #tpu.pipeline_mode<synchronous>, transform_indices = @transform_6, window_bounds = array<i64: 8, 384>}]} {
    %c0 = arith.constant 0 : index
    %c0_0 = arith.constant 0 : index
    %0 = vector.load %arg1[%c0, %c0_0] : memref<8x32xf32, #tpu.memory_space<vmem>>, vector<8x32xf32>
    %c0_1 = arith.constant 0 : index
    %c0_2 = arith.constant 0 : index
    %1 = vector.load %arg6[%c0_1, %c0_2] : memref<10x384xf32, #tpu.memory_space<vmem>>, vector<10x384xf32>
    %2 = vector.extract_strided_slice %1 {offsets = [0, 0], sizes = [1, 256], strides = [1, 1]} : vector<10x384xf32> to vector<1x256xf32>
    %3 = vector.extract_strided_slice %1 {offsets = [1, 0], sizes = [1, 256], strides = [1, 1]} : vector<10x384xf32> to vector<1x256xf32>
    %4 = vector.extract_strided_slice %1 {offsets = [2, 0], sizes = [1, 256], strides = [1, 1]} : vector<10x384xf32> to vector<1x256xf32>
    %5 = vector.extract_strided_slice %1 {offsets = [3, 0], sizes = [1, 256], strides = [1, 1]} : vector<10x384xf32> to vector<1x256xf32>
    %6 = vector.extract_strided_slice %1 {offsets = [4, 0], sizes = [1, 256], strides = [1, 1]} : vector<10x384xf32> to vector<1x256xf32>
    %7 = vector.extract_strided_slice %1 {offsets = [5, 0], sizes = [1, 256], strides = [1, 1]} : vector<10x384xf32> to vector<1x256xf32>
    %8 = vector.extract_strided_slice %1 {offsets = [6, 0], sizes = [1, 256], strides = [1, 1]} : vector<10x384xf32> to vector<1x256xf32>
    %9 = vector.extract_strided_slice %1 {offsets = [7, 0], sizes = [1, 256], strides = [1, 1]} : vector<10x384xf32> to vector<1x256xf32>
    %10 = vector.extract_strided_slice %1 {offsets = [8, 0], sizes = [1, 256], strides = [1, 1]} : vector<10x384xf32> to vector<1x256xf32>
    %11 = vector.extract_strided_slice %1 {offsets = [9, 0], sizes = [1, 384], strides = [1, 1]} : vector<10x384xf32> to vector<1x384xf32>
    %12 = tpu.iota {dimensions = array<i32: 0>} : vector<8x1xi32>
    %c4_i32 = arith.constant 4 : i32
    %13 = vector.broadcast %c4_i32 : i32 to vector<8x1xi32>
    %14 = arith.cmpi slt, %12, %13 : vector<8x1xi32>
    %15 = arith.extui %14 : vector<8x1xi1> to vector<8x1xi32>
    %16 = arith.sitofp %15 : vector<8x1xi32> to vector<8x1xf32>
    %c0_3 = arith.constant 0 : index
    %c0_4 = arith.constant 0 : index
    %17 = vector.load %arg2[%c0_3, %c0_4] : memref<32x256xf32, #tpu.memory_space<vmem>>, vector<32x256xf32>
    %cst = arith.constant dense<0.000000e+00> : vector<8x256xf32>
    %18 = tpu.matmul %0, %17, %cst {dimension_numbers = #tpu.dot_dimension_numbers<[1], [0], [0], [1], [0, 0, 1, 1], [], []>} : vector<8x32xf32>, vector<32x256xf32>, vector<8x256xf32> -> vector<8x256xf32>
    %19 = vector.broadcast %2 : vector<1x256xf32> to vector<8x256xf32>
    %20 = arith.addf %18, %19 : vector<8x256xf32>
    %21 = vector.broadcast %16 : vector<8x1xf32> to vector<8x256xf32>
    %22 = arith.mulf %20, %21 : vector<8x256xf32>
    %cst_5 = arith.constant dense<0.000000e+00> : vector<256xf32>
    %23 = vector.multi_reduction <add>, %22, %cst_5 [0] : vector<8x256xf32> to vector<256xf32>
    %24 = vector.shape_cast %23 : vector<256xf32> to vector<1x256xf32>
    %25 = arith.mulf %22, %20 : vector<8x256xf32>
    %cst_6 = arith.constant dense<0.000000e+00> : vector<256xf32>
    %26 = vector.multi_reduction <add>, %25, %cst_6 [0] : vector<8x256xf32> to vector<256xf32>
    %27 = vector.shape_cast %26 : vector<256xf32> to vector<1x256xf32>
    %cst_7 = arith.constant 2.500000e-01 : f32
    %28 = vector.broadcast %cst_7 : f32 to vector<1x256xf32>
    %29 = arith.mulf %24, %28 : vector<1x256xf32>
    %cst_8 = arith.constant 2.500000e-01 : f32
    %30 = vector.broadcast %cst_8 : f32 to vector<1x256xf32>
    %31 = arith.mulf %27, %30 : vector<1x256xf32>
    %32 = arith.mulf %29, %29 : vector<1x256xf32>
    %33 = arith.subf %31, %32 : vector<1x256xf32>
    %34 = vector.broadcast %29 : vector<1x256xf32> to vector<8x256xf32>
    %35 = arith.subf %20, %34 : vector<8x256xf32>
    %cst_9 = arith.constant 9.99999974E-6 : f32
    %36 = vector.broadcast %cst_9 : f32 to vector<1x256xf32>
    %37 = arith.addf %33, %36 : vector<1x256xf32>
    %38 = math.rsqrt %37 : vector<1x256xf32>
    %39 = vector.broadcast %38 : vector<1x256xf32> to vector<8x256xf32>
    %40 = arith.mulf %35, %39 : vector<8x256xf32>
    %41 = vector.broadcast %3 : vector<1x256xf32> to vector<8x256xf32>
    %42 = arith.mulf %40, %41 : vector<8x256xf32>
    %43 = vector.broadcast %4 : vector<1x256xf32> to vector<8x256xf32>
    %44 = arith.addf %42, %43 : vector<8x256xf32>
    %cst_10 = arith.constant 0.000000e+00 : f32
    %45 = vector.broadcast %cst_10 : f32 to vector<8x256xf32>
    %46 = arith.maximumf %44, %45 : vector<8x256xf32>
    %c0_11 = arith.constant 0 : index
    %c0_12 = arith.constant 0 : index
    %47 = vector.load %arg3[%c0_11, %c0_12] : memref<256x256xf32, #tpu.memory_space<vmem>>, vector<256x256xf32>
    %cst_13 = arith.constant dense<0.000000e+00> : vector<8x256xf32>
    %48 = tpu.matmul %46, %47, %cst_13 {dimension_numbers = #tpu.dot_dimension_numbers<[1], [0], [0], [1], [0, 0, 1, 1], [], []>} : vector<8x256xf32>, vector<256x256xf32>, vector<8x256xf32> -> vector<8x256xf32>
    %49 = vector.broadcast %5 : vector<1x256xf32> to vector<8x256xf32>
    %50 = arith.addf %48, %49 : vector<8x256xf32>
    %51 = vector.broadcast %16 : vector<8x1xf32> to vector<8x256xf32>
    %52 = arith.mulf %50, %51 : vector<8x256xf32>
    %cst_14 = arith.constant dense<0.000000e+00> : vector<256xf32>
    %53 = vector.multi_reduction <add>, %52, %cst_14 [0] : vector<8x256xf32> to vector<256xf32>
    %54 = vector.shape_cast %53 : vector<256xf32> to vector<1x256xf32>
    %55 = arith.mulf %52, %50 : vector<8x256xf32>
    %cst_15 = arith.constant dense<0.000000e+00> : vector<256xf32>
    %56 = vector.multi_reduction <add>, %55, %cst_15 [0] : vector<8x256xf32> to vector<256xf32>
    %57 = vector.shape_cast %56 : vector<256xf32> to vector<1x256xf32>
    %cst_16 = arith.constant 2.500000e-01 : f32
    %58 = vector.broadcast %cst_16 : f32 to vector<1x256xf32>
    %59 = arith.mulf %54, %58 : vector<1x256xf32>
    %cst_17 = arith.constant 2.500000e-01 : f32
    %60 = vector.broadcast %cst_17 : f32 to vector<1x256xf32>
    %61 = arith.mulf %57, %60 : vector<1x256xf32>
    %62 = arith.mulf %59, %59 : vector<1x256xf32>
    %63 = arith.subf %61, %62 : vector<1x256xf32>
    %64 = vector.broadcast %59 : vector<1x256xf32> to vector<8x256xf32>
    %65 = arith.subf %50, %64 : vector<8x256xf32>
    %cst_18 = arith.constant 9.99999974E-6 : f32
    %66 = vector.broadcast %cst_18 : f32 to vector<1x256xf32>
    %67 = arith.addf %63, %66 : vector<1x256xf32>
    %68 = math.rsqrt %67 : vector<1x256xf32>
    %69 = vector.broadcast %68 : vector<1x256xf32> to vector<8x256xf32>
    %70 = arith.mulf %65, %69 : vector<8x256xf32>
    %71 = vector.broadcast %6 : vector<1x256xf32> to vector<8x256xf32>
    %72 = arith.mulf %70, %71 : vector<8x256xf32>
    %73 = vector.broadcast %7 : vector<1x256xf32> to vector<8x256xf32>
    %74 = arith.addf %72, %73 : vector<8x256xf32>
    %cst_19 = arith.constant 0.000000e+00 : f32
    %75 = vector.broadcast %cst_19 : f32 to vector<8x256xf32>
    %76 = arith.maximumf %74, %75 : vector<8x256xf32>
    %c0_20 = arith.constant 0 : index
    %c0_21 = arith.constant 0 : index
    %77 = vector.load %arg4[%c0_20, %c0_21] : memref<256x256xf32, #tpu.memory_space<vmem>>, vector<256x256xf32>
    %cst_22 = arith.constant dense<0.000000e+00> : vector<8x256xf32>
    %78 = tpu.matmul %76, %77, %cst_22 {dimension_numbers = #tpu.dot_dimension_numbers<[1], [0], [0], [1], [0, 0, 1, 1], [], []>} : vector<8x256xf32>, vector<256x256xf32>, vector<8x256xf32> -> vector<8x256xf32>
    %79 = vector.broadcast %8 : vector<1x256xf32> to vector<8x256xf32>
    %80 = arith.addf %78, %79 : vector<8x256xf32>
    %81 = vector.broadcast %16 : vector<8x1xf32> to vector<8x256xf32>
    %82 = arith.mulf %80, %81 : vector<8x256xf32>
    %cst_23 = arith.constant dense<0.000000e+00> : vector<256xf32>
    %83 = vector.multi_reduction <add>, %82, %cst_23 [0] : vector<8x256xf32> to vector<256xf32>
    %84 = vector.shape_cast %83 : vector<256xf32> to vector<1x256xf32>
    %85 = arith.mulf %82, %80 : vector<8x256xf32>
    %cst_24 = arith.constant dense<0.000000e+00> : vector<256xf32>
    %86 = vector.multi_reduction <add>, %85, %cst_24 [0] : vector<8x256xf32> to vector<256xf32>
    %87 = vector.shape_cast %86 : vector<256xf32> to vector<1x256xf32>
    %cst_25 = arith.constant 2.500000e-01 : f32
    %88 = vector.broadcast %cst_25 : f32 to vector<1x256xf32>
    %89 = arith.mulf %84, %88 : vector<1x256xf32>
    %cst_26 = arith.constant 2.500000e-01 : f32
    %90 = vector.broadcast %cst_26 : f32 to vector<1x256xf32>
    %91 = arith.mulf %87, %90 : vector<1x256xf32>
    %92 = arith.mulf %89, %89 : vector<1x256xf32>
    %93 = arith.subf %91, %92 : vector<1x256xf32>
    %94 = vector.broadcast %89 : vector<1x256xf32> to vector<8x256xf32>
    %95 = arith.subf %80, %94 : vector<8x256xf32>
    %cst_27 = arith.constant 9.99999974E-6 : f32
    %96 = vector.broadcast %cst_27 : f32 to vector<1x256xf32>
    %97 = arith.addf %93, %96 : vector<1x256xf32>
    %98 = math.rsqrt %97 : vector<1x256xf32>
    %99 = vector.broadcast %98 : vector<1x256xf32> to vector<8x256xf32>
    %100 = arith.mulf %95, %99 : vector<8x256xf32>
    %101 = vector.broadcast %9 : vector<1x256xf32> to vector<8x256xf32>
    %102 = arith.mulf %100, %101 : vector<8x256xf32>
    %103 = vector.broadcast %10 : vector<1x256xf32> to vector<8x256xf32>
    %104 = arith.addf %102, %103 : vector<8x256xf32>
    %cst_28 = arith.constant 0.000000e+00 : f32
    %105 = vector.broadcast %cst_28 : f32 to vector<8x32xf32>
    %106 = tpu.concatenate %0, %0, %0, %0, %0, %0, %0, %105 in 1 : vector<8x32xf32>, vector<8x32xf32>, vector<8x32xf32>, vector<8x32xf32>, vector<8x32xf32>, vector<8x32xf32>, vector<8x32xf32>, vector<8x32xf32> -> vector<8x256xf32>
    %107 = arith.addf %104, %106 : vector<8x256xf32>
    %cst_29 = arith.constant 0.000000e+00 : f32
    %108 = vector.broadcast %cst_29 : f32 to vector<8x256xf32>
    %109 = arith.maximumf %107, %108 : vector<8x256xf32>
    %c0_30 = arith.constant 0 : index
    %c0_31 = arith.constant 0 : index
    %110 = vector.load %arg5[%c0_30, %c0_31] : memref<256x384xf32, #tpu.memory_space<vmem>>, vector<256x384xf32>
    %cst_32 = arith.constant dense<0.000000e+00> : vector<8x384xf32>
    %111 = tpu.matmul %109, %110, %cst_32 {dimension_numbers = #tpu.dot_dimension_numbers<[1], [0], [0], [1], [0, 0, 1, 1], [], []>} : vector<8x256xf32>, vector<256x384xf32>, vector<8x384xf32> -> vector<8x384xf32>
    %112 = vector.broadcast %11 : vector<1x384xf32> to vector<8x384xf32>
    %113 = arith.addf %111, %112 : vector<8x384xf32>
    %114 = vector.extract_strided_slice %113 {offsets = [0, 256], sizes = [8, 128], strides = [1, 1]} : vector<8x384xf32> to vector<8x128xf32>
    %115 = tpu.iota {dimensions = array<i32: 1>} : vector<8x128xi32>
    %c104_i32 = arith.constant 104 : i32
    %116 = vector.broadcast %c104_i32 : i32 to vector<8x128xi32>
    %117 = arith.cmpi sge, %115, %116 : vector<8x128xi32>
    %c110_i32 = arith.constant 110 : i32
    %118 = vector.broadcast %c110_i32 : i32 to vector<8x128xi32>
    %119 = arith.cmpi slt, %115, %118 : vector<8x128xi32>
    %120 = arith.andi %117, %119 : vector<8x128xi1>
    %cst_33 = arith.constant 0xFF800000 : f32
    %121 = vector.broadcast %cst_33 : f32 to vector<8x128xf32>
    %122 = arith.select %120, %114, %121 : vector<8x128xi1>, vector<8x128xf32>
    %cst_34 = arith.constant dense<0xFF800000> : vector<8xf32>
    %123 = vector.multi_reduction <maximumf>, %122, %cst_34 [1] : vector<8x128xf32> to vector<8xf32>
    %124 = vector.shape_cast %123 : vector<8xf32> to vector<8x1xf32>
    %125 = vector.broadcast %124 : vector<8x1xf32> to vector<8x128xf32>
    %126 = arith.subf %122, %125 : vector<8x128xf32>
    %127 = math.exp %126 : vector<8x128xf32>
    %cst_35 = arith.constant dense<0.000000e+00> : vector<8xf32>
    %128 = vector.multi_reduction <add>, %127, %cst_35 [1] : vector<8x128xf32> to vector<8xf32>
    %129 = vector.shape_cast %128 : vector<8xf32> to vector<8x1xf32>
    %130 = vector.broadcast %129 : vector<8x1xf32> to vector<8x128xf32>
    %131 = arith.divf %127, %130 : vector<8x128xf32>
    %132 = arith.select %120, %131, %114 : vector<8x128xi1>, vector<8x128xf32>
    %133 = vector.extract_strided_slice %113 {offsets = [0, 0], sizes = [8, 256], strides = [1, 1]} : vector<8x384xf32> to vector<8x256xf32>
    %c0_36 = arith.constant 0 : index
    %c0_37 = arith.constant 0 : index
    %134 = vector.load %arg7[%c0_36, %c0_37] : memref<8x384xf32, #tpu.memory_space<vmem>>, vector<8x256xf32>
    tpu.vector_store %arg7[%c0_36, %c0_37], %133 {strides = array<i32>} : memref<8x384xf32, #tpu.memory_space<vmem>>, vector<8x256xf32>,
    %c0_38 = arith.constant 0 : index
    %c256 = arith.constant 256 : index
    %135 = vector.load %arg7[%c0_38, %c256] : memref<8x384xf32, #tpu.memory_space<vmem>>, vector<8x128xf32>
    tpu.vector_store %arg7[%c0_38, %c256], %132 {strides = array<i32>} : memref<8x384xf32, #tpu.memory_space<vmem>>, vector<8x128xf32>,
    return
  }
  func.func @transform_0(%arg0: i32) -> (i32, i32) {
    %c0_i32 = arith.constant 0 : i32
    %c0_i32_0 = arith.constant 0 : i32
    %c0_i32_1 = arith.constant 0 : i32
    return %c0_i32, %c0_i32_0 : i32, i32
  }
  func.func @transform_1(%arg0: i32) -> (i32, i32) {
    %c0_i32 = arith.constant 0 : i32
    %c0_i32_0 = arith.constant 0 : i32
    %c0_i32_1 = arith.constant 0 : i32
    return %c0_i32, %c0_i32_0 : i32, i32
  }
  func.func @transform_2(%arg0: i32) -> (i32, i32) {
    %c0_i32 = arith.constant 0 : i32
    %c0_i32_0 = arith.constant 0 : i32
    %c0_i32_1 = arith.constant 0 : i32
    return %c0_i32, %c0_i32_0 : i32, i32
  }
  func.func @transform_3(%arg0: i32) -> (i32, i32) {
    %c0_i32 = arith.constant 0 : i32
    %c0_i32_0 = arith.constant 0 : i32
    %c0_i32_1 = arith.constant 0 : i32
    return %c0_i32, %c0_i32_0 : i32, i32
  }
  func.func @transform_4(%arg0: i32) -> (i32, i32) {
    %c0_i32 = arith.constant 0 : i32
    %c0_i32_0 = arith.constant 0 : i32
    %c0_i32_1 = arith.constant 0 : i32
    return %c0_i32, %c0_i32_0 : i32, i32
  }
  func.func @transform_5(%arg0: i32) -> (i32, i32) {
    %c0_i32 = arith.constant 0 : i32
    %c0_i32_0 = arith.constant 0 : i32
    %c0_i32_1 = arith.constant 0 : i32
    return %c0_i32, %c0_i32_0 : i32, i32
  }
  func.func @transform_6(%arg0: i32) -> (i32, i32) {
    %c0_i32 = arith.constant 0 : i32
    %c0_i32_0 = arith.constant 0 : i32
    %c0_i32_1 = arith.constant 0 : i32
    return %c0_i32, %c0_i32_0 : i32, i32
  }
}

</mosaic_0001>

<llo_original>
// kernel: multimodal_decoder_pallas.1
$region0: #{multimodal_decoder_pallas.1}
  #allocation0 [shape = 'u32[]', space=smem, size = 0x4, offset = 0x4, fixed_abs, tag = 'smem constant byte address 0x4 - core index']
  #allocation1 [shape = 'u32[144,128]{1,0:T(1,128)}', space=vmem, size = 0x12000, scoped, tag = 'internal scratch']
  %s0 = inlined_call_operand.vmem [shape: f32[8,32], index: 0, kind: input, shape index: {}]
  %s1 = inlined_call_operand.hbm [shape: f32[32,256], index: 1, kind: input, shape index: {}]
  %s2 = inlined_call_operand.hbm [shape: f32[256,256], index: 2, kind: input, shape index: {}]
  %s3 = inlined_call_operand.hbm [shape: f32[256,256], index: 3, kind: input, shape index: {}]
  %s4 = inlined_call_operand.hbm [shape: f32[256,384], index: 4, kind: input, shape index: {}]
  %s5 = inlined_call_operand.hbm [shape: f32[10,384], index: 5, kind: input, shape index: {}]
  %s6 = inlined_call_operand.vmem [shape: f32[8,384], index: 6, kind: output, shape index: {}]
  %s7 = sld [smem:[#allocation0]]
  $region54: #{multimodal_decoder_pallas.1} parent=0
    _
  %s9 = ssub.s32 1, %s7
  %s10 = scalar_select 0, %s9, %s7
  $region1: #{multimodal_decoder_pallas.1} parent=0
    #allocation2 [shape = 'u8[32768]{0}', space=vmem, size = 0x8000, scoped, tag = 'input window, operand 1, single buffered']
    #allocation3 [shape = 's32[1]{0}', space=sflag, size = 0x4, scoped, tag = 'scoped memory for multimodal_decoder_pallas.1']
    #allocation4 [shape = 'u8[262144]{0}', space=vmem, size = 0x40000, scoped, tag = 'input window, operand 2, single buffered']
    #allocation5 [shape = 's32[1]{0}', space=sflag, size = 0x4, scoped, tag = 'scoped memory for multimodal_decoder_pallas.1']
    #allocation6 [shape = 'u8[262144]{0}', space=vmem, size = 0x40000, scoped, tag = 'input window, operand 3, single buffered']
    #allocation7 [shape = 'u8[393216]{0}', space=vmem, size = 0x60000, scoped, tag = 'input window, operand 4, single buffered']
    #allocation8 [shape = 's32[1]{0}', space=sflag, size = 0x4, scoped, tag = 'scoped memory for multimodal_decoder_pallas.1']
    #allocation9 [shape = 'u8[24576]{0}', space=vmem, size = 0x6000, scoped, tag = 'input window, operand 5, single buffered']
    %11 = vsyncpa [#allocation3], 0
    %12 = vsyncpa [#allocation5], 0
    %13 = vsyncpa [#allocation8], 0
    // Predicated region
    $region2: #{multimodal_decoder_pallas.1} parent=1 // pred_check
      _
    $region3: #{multimodal_decoder_pallas.1} parent=1 // pred_check_branch
      %15 = sbr.rel (0) target = $region5
    $region4: #{multimodal_decoder_pallas.1} parent=1 // pred_region
      _
    $region5: #{multimodal_decoder_pallas.1} parent=1 // pred_fallthru
      _
    // Predicated region
    $region6: #{multimodal_decoder_pallas.1} parent=1 // pred_check
      _
    $region7: #{multimodal_decoder_pallas.1} parent=1 // pred_check_branch
      %17 = sbr.rel (0) target = $region9
    $region8: #{multimodal_decoder_pallas.1} parent=1 // pred_region
      %s19 = ssub.s32 1024, 1024
      %20 = vsyncadd [#allocation3], %s19
      %s21 = sshll.u32 [#allocation2], 4
      %s22 = int_to_ptr.vmem [resolvable:$true] %s21
      %27 = dma.hbm_to_vmem [thread:$0]  %s1, 1024, %s22, [#allocation3], 256, 256, 16
    $region9: #{multimodal_decoder_pallas.1} parent=1 // pred_fallthru
      _
    // Predicated region
    $region10: #{multimodal_decoder_pallas.1} parent=1 // pred_check
      _
    $region11: #{multimodal_decoder_pallas.1} parent=1 // pred_check_branch
      %29 = sbr.rel (0) target = $region13
    $region12: #{multimodal_decoder_pallas.1} parent=1 // pred_region
      %s31 = ssub.s32 8192, 8192
      %32 = vsyncadd [#allocation5], %s31
      %s33 = sshll.u32 [#allocation4], 4
      %s34 = int_to_ptr.vmem [resolvable:$true] %s33
      %39 = dma.hbm_to_vmem [thread:$0]  %s2, 8192, %s34, [#allocation5], 256, 256, 16
    $region13: #{multimodal_decoder_pallas.1} parent=1 // pred_fallthru
      _
    // Predicated region
    $region14: #{multimodal_decoder_pallas.1} parent=1 // pred_check
      _
    $region15: #{multimodal_decoder_pallas.1} parent=1 // pred_check_branch
      %41 = sbr.rel (0) target = $region17
    $region16: #{multimodal_decoder_pallas.1} parent=1 // pred_region
      %s43 = ssub.s32 8192, 8192
      %44 = vsyncadd [#allocation5], %s43
      %s45 = sshll.u32 [#allocation6], 4
      %s46 = int_to_ptr.vmem [resolvable:$true] %s45
      %51 = dma.hbm_to_vmem [thread:$0]  %s3, 8192, %s46, [#allocation5], 256, 256, 16
    $region17: #{multimodal_decoder_pallas.1} parent=1 // pred_fallthru
      _
    // Predicated region
    $region18: #{multimodal_decoder_pallas.1} parent=1 // pred_check
      _
    $region19: #{multimodal_decoder_pallas.1} parent=1 // pred_check_branch
      %53 = sbr.rel (0) target = $region21
    $region20: #{multimodal_decoder_pallas.1} parent=1 // pred_region
      %s55 = ssub.s32 12288, 12288
      %56 = vsyncadd [#allocation8], %s55
      %s57 = sshll.u32 [#allocation7], 4
      %s58 = int_to_ptr.vmem [resolvable:$true] %s57
      %63 = dma.hbm_to_vmem [thread:$0]  %s4, 12288, %s58, [#allocation8], 384, 384, 24
    $region21: #{multimodal_decoder_pallas.1} parent=1 // pred_fallthru
      _
    // Predicated region
    $region22: #{multimodal_decoder_pallas.1} parent=1 // pred_check
      _
    $region23: #{multimodal_decoder_pallas.1} parent=1 // pred_check_branch
      %65 = sbr.rel (0) target = $region25
    $region24: #{multimodal_decoder_pallas.1} parent=1 // pred_region
      %s67 = ssub.s32 768, 768
      %68 = vsyncadd [#allocation8], %s67
      %s69 = sshll.u32 [#allocation9], 4
      %s70 = int_to_ptr.vmem [resolvable:$true] %s69
      %75 = dma.hbm_to_vmem [thread:$0]  %s5, 768, %s70, [#allocation8], 384, 384, 24
    $region25: #{multimodal_decoder_pallas.1} parent=1 // pred_fallthru
      _
    // Predicated region
    $region26: #{multimodal_decoder_pallas.1} parent=1 // pred_check
      _
    $region27: #{multimodal_decoder_pallas.1} parent=1 // pred_check_branch
      %77 = sbr.rel (0) target = $region29
    $region28: #{multimodal_decoder_pallas.1} parent=1 // pred_region
      %78 = dma.done [#allocation3], 1024
    $region29: #{multimodal_decoder_pallas.1} parent=1 // pred_fallthru
      _
    // Predicated region
    $region30: #{multimodal_decoder_pallas.1} parent=1 // pred_check
      _
    $region31: #{multimodal_decoder_pallas.1} parent=1 // pred_check_branch
      %80 = sbr.rel (0) target = $region33
    $region32: #{multimodal_decoder_pallas.1} parent=1 // pred_region
      %81 = dma.done [#allocation5], 8192
    $region33: #{multimodal_decoder_pallas.1} parent=1 // pred_fallthru
      _
    // Predicated region
    $region34: #{multimodal_decoder_pallas.1} parent=1 // pred_check
      _
    $region35: #{multimodal_decoder_pallas.1} parent=1 // pred_check_branch
      %83 = sbr.rel (0) target = $region37
    $region36: #{multimodal_decoder_pallas.1} parent=1 // pred_region
      %84 = dma.done [#allocation5], 8192
    $region37: #{multimodal_decoder_pallas.1} parent=1 // pred_fallthru
      _
    // Predicated region
    $region38: #{multimodal_decoder_pallas.1} parent=1 // pred_check
      _
    $region39: #{multimodal_decoder_pallas.1} parent=1 // pred_check_branch
      %86 = sbr.rel (0) target = $region41
    $region40: #{multimodal_decoder_pallas.1} parent=1 // pred_region
      %87 = dma.done [#allocation8], 12288
    $region41: #{multimodal_decoder_pallas.1} parent=1 // pred_fallthru
      _
    // Predicated region
    $region42: #{multimodal_decoder_pallas.1} parent=1 // pred_check
      _
    $region43: #{multimodal_decoder_pallas.1} parent=1 // pred_check_branch
      %89 = sbr.rel (0) target = $region45
    $region44: #{multimodal_decoder_pallas.1} parent=1 // pred_region
      %90 = dma.done [#allocation8], 768
    $region45: #{multimodal_decoder_pallas.1} parent=1 // pred_fallthru
      _
    %v91 = vld [vmem:[%s0] sm:$0xff]
    %v92 = vld [vmem:[#allocation9] sm:$0xff]
    %v93 = vld [vmem:[#allocation9 + $0x8] sm:$0xff]
    %v94 = vld [vmem:[#allocation9 + $0x18] sm:$0x3]
    %v95 = vld [vmem:[#allocation9 + $0x20] sm:$0x3]
    %v96 = vld [vmem:[#allocation9 + $0x28] sm:$0x3]
    %v97 = vlaneseq
    %v98 = vshrl.u32 %v97, 7
    %vm99 = vcmp.lt.s32.totalorder %v98, 4
    %v100 = vsel %vm99, 1, 0
    %v101 = vcvt.s32.f32 %v100
    %v102 = vld [vmem:[#allocation2] sm:$0xff]
    %v103 = vld [vmem:[#allocation2 + $0x8] sm:$0xff]
    %v104 = vld [vmem:[#allocation2 + $0x10] sm:$0xff]
    %v105 = vld [vmem:[#allocation2 + $0x18] sm:$0xff]
    %v106 = vld [vmem:[#allocation2 + $0x20] sm:$0xff]
    %v107 = vld [vmem:[#allocation2 + $0x28] sm:$0xff]
    %v108 = vld [vmem:[#allocation2 + $0x30] sm:$0xff]
    %v109 = vld [vmem:[#allocation2 + $0x38] sm:$0xff]
    %v110 = vlaneseq
    %v111 = vshrl.u32 %v110, 7
    %v112 = vsub.s32 0, %v111
    %v113 = vrot.slane %v92, %v112
    %v114 = vlaneseq
    %v115 = vshrl.u32 %v114, 7
    %v116 = vsub.s32 0, %v115
    %v117 = vrot.slane %v93, %v116
    %vm118 = vcmask 261120
    %v120 = vsel %vm118, %v91, 0
    %122 = vmatprep.subr.mxu0 0.0
    %123 = vmatpush1.msra.mxu0 0.0
    %124 = vmatprep.subr.mxu0 0.0
    %125 = vmatpush1.msra.mxu0 0.0
    %126 = vmatprep.subr.mxu0 0.0
    %127 = vmatpush1.msra.mxu0 0.0
    %128 = vmatprep.subr.mxu0 0.0
    %129 = vmatpush1.msra.mxu0 0.0
    %130 = vmatprep.subr.mxu0 0.0
    %131 = vmatpush1.msra.mxu0 0.0
    %132 = vmatprep.subr.mxu0 0.0
    %133 = vmatpush1.msra.mxu0 0.0
    %134 = vmatprep.subr.mxu0 0.0
    %135 = vmatpush1.msra.mxu0 0.0
    %136 = vmatprep.subr.mxu0 0.0
    %137 = vmatpush1.msra.mxu0 0.0
    %138 = vmatprep.subr.mxu0 0.0
    %139 = vmatpush1.msra.mxu0 0.0
    %140 = vmatprep.subr.mxu0 0.0
    %141 = vmatpush1.msra.mxu0 0.0
    %142 = vmatprep.subr.mxu0 0.0
    %143 = vmatpush1.msra.mxu0 0.0
    %144 = vmatprep.subr.mxu0 0.0
    %145 = vmatpush1.msra.mxu0 0.0
    %146 = vmatprep.subr.mxu0 %v109
    %147 = vmatpush1.msra.mxu0 %v108
    %148 = vmatprep.subr.mxu0 %v107
    %149 = vmatpush1.msra.mxu0 %v106
    %150 = vmatprep.subr.mxu0 %v105
    %151 = vmatpush1.msra.mxu0 %v104
    %152 = vmatprep.subr.mxu0 %v103
    %153 = vmatpush1.msra.mxu0 %v102
    %154 = vmatprep.subr.mxu0 0.0
    %155 = vmatpush2.msra.mxu0 0.0
    %156 = vmatprep.subr.mxu0 0.0
    %157 = vmatpush2.msra.mxu0 0.0
    %158 = vmatprep.subr.mxu0 0.0
    %159 = vmatpush2.msra.mxu0 0.0
    %160 = vmatprep.subr.mxu0 0.0
    %161 = vmatpush2.msra.mxu0 0.0
    %162 = vmatprep.subr.mxu0 0.0
    %163 = vmatpush2.msra.mxu0 0.0
    %164 = vmatprep.subr.mxu0 0.0
    %165 = vmatpush2.msra.mxu0 0.0
    %166 = vmatprep.subr.mxu0 0.0
    %167 = vmatpush2.msra.mxu0 0.0
    %168 = vmatprep.subr.mxu0 0.0
    %169 = vmatpush2.msra.mxu0 0.0
    %170 = vmatprep.subr.mxu0 0.0
    %171 = vmatpush2.msra.mxu0 0.0
    %172 = vmatprep.subr.mxu0 0.0
    %173 = vmatpush2.msra.mxu0 0.0
    %174 = vmatprep.subr.mxu0 0.0
    %175 = vmatpush2.msra.mxu0 0.0
    %176 = vmatprep.subr.mxu0 0.0
    %177 = vmatpush2.msra.mxu0 0.0
    %178 = vmatprep.subr.mxu0 0.0
    %179 = vmatpush2.msra.mxu0 0.0
    %180 = vmatprep.subr.mxu0 0.0
    %181 = vmatpush2.msra.mxu0 0.0
    %182 = vmatprep.subr.mxu0 0.0
    %183 = vmatpush2.msra.mxu0 0.0
    %184 = vmatprep.subr.mxu0 0.0
    %185 = vmatpush2.msra.mxu0 0.0
    %186 = vmatprep.mubr.f32.mxu0 0.0
    %187 = vmatmul.mubr.f32.gmra.mxu0 %v120
    %v188 = vpop.f32.mrf.mxu0
    %v189 = vadd.f32 %v113, %v188
    %v190 = vpop.f32.mrf.mxu0
    %v191 = vadd.f32 %v117, %v190
    %192 = vdwg.mxu0
    %v193 = vmul.f32 %v189, %v101
    %v194 = vmul.f32 %v191, %v101
    %v195 = vrot.slane %v193, 4
    %v196 = vadd.f32 %v193, %v195
    %v197 = vrot.slane %v196, 2
    %v198 = vadd.f32 %v196, %v197
    %v199 = vrot.slane %v198, 1
    %v200 = vadd.f32 %v198, %v199
    %v201 = vrot.slane %v194, 4
    %v202 = vadd.f32 %v194, %v201
    %v203 = vrot.slane %v202, 2
    %v204 = vadd.f32 %v202, %v203
    %v205 = vrot.slane %v204, 1
    %v206 = vadd.f32 %v204, %v205
    %v207 = vmul.f32 %v193, %v189
    %v208 = vmul.f32 %v194, %v191
    %v209 = vrot.slane %v207, 4
    %v210 = vadd.f32 %v207, %v209
    %v211 = vrot.slane %v210, 2
    %v212 = vadd.f32 %v210, %v211
    %v213 = vrot.slane %v212, 1
    %v214 = vadd.f32 %v212, %v213
    %v215 = vrot.slane %v208, 4
    %v216 = vadd.f32 %v208, %v215
    %v217 = vrot.slane %v216, 2
    %v218 = vadd.f32 %v216, %v217
    %v219 = vrot.slane %v218, 1
    %v220 = vadd.f32 %v218, %v219
    %v221 = vmul.f32 %v200, 0.25
    %v222 = vmul.f32 %v206, 0.25
    %v223 = vmul.f32 %v214, 0.25
    %v224 = vmul.f32 %v220, 0.25
    %v225 = vmul.f32 %v221, %v221
    %v226 = vmul.f32 %v222, %v222
    %v227 = vsub.f32 %v223, %v225
    %v228 = vsub.f32 %v224, %v226
    %v229 = vsub.f32 %v189, %v221
    %v230 = vsub.f32 %v191, %v222
    %v231 = vadd.f32 %v227, 1e-05
    %v232 = vadd.f32 %v228, 1e-05
    %v233 = vrsqrt.pop %v231
    %v234 = vrsqrt.pop %v232
    %v235 = vmul.f32 %v229, %v233
    %v236 = vmul.f32 %v230, %v234
    %v237 = vlaneseq
    %v238 = vshrl.u32 %v237, 7
    %v239 = vsub.s32 1, %v238
    %v240 = vrot.slane %v92, %v239
    %v241 = vlaneseq
    %v242 = vshrl.u32 %v241, 7
    %v243 = vsub.s32 1, %v242
    %v244 = vrot.slane %v93, %v243
    %v245 = vmul.f32 %v235, %v240
    %v246 = vmul.f32 %v236, %v244
    %v247 = vlaneseq
    %v248 = vshrl.u32 %v247, 7
    %v249 = vsub.s32 2, %v248
    %v250 = vrot.slane %v92, %v249
    %v251 = vlaneseq
    %v252 = vshrl.u32 %v251, 7
    %v253 = vsub.s32 2, %v252
    %v254 = vrot.slane %v93, %v253
    %v255 = vadd.f32 %v245, %v250
    %v256 = vadd.f32 %v246, %v254
    %v257 = vmax.f32 %v255, 0.0
    %v258 = vmax.f32 %v256, 0.0
    %v259 = vld [vmem:[#allocation4] sm:$0xff]
    %v260 = vld [vmem:[#allocation4 + $0x8] sm:$0xff]
    %v261 = vld [vmem:[#allocation4 + $0x10] sm:$0xff]
    %v262 = vld [vmem:[#allocation4 + $0x18] sm:$0xff]
    %v263 = vld [vmem:[#allocation4 + $0x20] sm:$0xff]
    %v264 = vld [vmem:[#allocation4 + $0x28] sm:$0xff]
    %v265 = vld [vmem:[#allocation4 + $0x30] sm:$0xff]
    %v266 = vld [vmem:[#allocation4 + $0x38] sm:$0xff]
    %v267 = vld [vmem:[#allocation4 + $0x40] sm:$0xff]
    %v268 = vld [vmem:[#allocation4 + $0x48] sm:$0xff]
    %v269 = vld [vmem:[#allocation4 + $0x50] sm:$0xff]
    %v270 = vld [vmem:[#allocation4 + $0x58] sm:$0xff]
    %v271 = vld [vmem:[#allocation4 + $0x60] sm:$0xff]
    %v272 = vld [vmem:[#allocation4 + $0x68] sm:$0xff]
    %v273 = vld [vmem:[#allocation4 + $0x70] sm:$0xff]
    %v274 = vld [vmem:[#allocation4 + $0x78] sm:$0xff]
    %v275 = vld [vmem:[#allocation4 + $0x80] sm:$0xff]
    %v276 = vld [vmem:[#allocation4 + $0x88] sm:$0xff]
    %v277 = vld [vmem:[#allocation4 + $0x90] sm:$0xff]
    %v278 = vld [vmem:[#allocation4 + $0x98] sm:$0xff]
    %v279 = vld [vmem:[#allocation4 + $0xa0] sm:$0xff]
    %v280 = vld [vmem:[#allocation4 + $0xa8] sm:$0xff]
    %v281 = vld [vmem:[#allocation4 + $0xb0] sm:$0xff]
    %v282 = vld [vmem:[#allocation4 + $0xb8] sm:$0xff]
    %v283 = vld [vmem:[#allocation4 + $0xc0] sm:$0xff]
    %v284 = vld [vmem:[#allocation4 + $0xc8] sm:$0xff]
    %v285 = vld [vmem:[#allocation4 + $0xd0] sm:$0xff]
    %v286 = vld [vmem:[#allocation4 + $0xd8] sm:$0xff]
    %v287 = vld [vmem:[#allocation4 + $0xe0] sm:$0xff]
    %v288 = vld [vmem:[#allocation4 + $0xe8] sm:$0xff]
    %v289 = vld [vmem:[#allocation4 + $0xf0] sm:$0xff]
    %v290 = vld [vmem:[#allocation4 + $0xf8] sm:$0xff]
    %v291 = vld [vmem:[#allocation4 + $0x100] sm:$0xff]
    %v292 = vld [vmem:[#allocation4 + $0x108] sm:$0xff]
    %v293 = vld [vmem:[#allocation4 + $0x110] sm:$0xff]
    %v294 = vld [vmem:[#allocation4 + $0x118] sm:$0xff]
    %v295 = vld [vmem:[#allocation4 + $0x120] sm:$0xff]
    %v296 = vld [vmem:[#allocation4 + $0x128] sm:$0xff]
    %v297 = vld [vmem:[#allocation4 + $0x130] sm:$0xff]
    %v298 = vld [vmem:[#allocation4 + $0x138] sm:$0xff]
    %v299 = vld [vmem:[#allocation4 + $0x140] sm:$0xff]
    %v300 = vld [vmem:[#allocation4 + $0x148] sm:$0xff]
    %v301 = vld [vmem:[#allocation4 + $0x150] sm:$0xff]
    %v302 = vld [vmem:[#allocation4 + $0x158] sm:$0xff]
    %v303 = vld [vmem:[#allocation4 + $0x160] sm:$0xff]
    %v304 = vld [vmem:[#allocation4 + $0x168] sm:$0xff]
    %v305 = vld [vmem:[#allocation4 + $0x170] sm:$0xff]
    %v306 = vld [vmem:[#allocation4 + $0x178] sm:$0xff]
    %v307 = vld [vmem:[#allocation4 + $0x180] sm:$0xff]
    %v308 = vld [vmem:[#allocation4 + $0x188] sm:$0xff]
    %v309 = vld [vmem:[#allocation4 + $0x190] sm:$0xff]
    %v310 = vld [vmem:[#allocation4 + $0x198] sm:$0xff]
    %v311 = vld [vmem:[#allocation4 + $0x1a0] sm:$0xff]
    %v312 = vld [vmem:[#allocation4 + $0x1a8] sm:$0xff]
    %v313 = vld [vmem:[#allocation4 + $0x1b0] sm:$0xff]
    %v314 = vld [vmem:[#allocation4 + $0x1b8] sm:$0xff]
    %v315 = vld [vmem:[#allocation4 + $0x1c0] sm:$0xff]
    %v316 = vld [vmem:[#allocation4 + $0x1c8] sm:$0xff]
    %v317 = vld [vmem:[#allocation4 + $0x1d0] sm:$0xff]
    %v318 = vld [vmem:[#allocation4 + $0x1d8] sm:$0xff]
    %v319 = vld [vmem:[#allocation4 + $0x1e0] sm:$0xff]
    %v320 = vld [vmem:[#allocation4 + $0x1e8] sm:$0xff]
    %v321 = vld [vmem:[#allocation4 + $0x1f0] sm:$0xff]
    %v322 = vld [vmem:[#allocation4 + $0x1f8] sm:$0xff]
    %v323 = vlaneseq
    %v324 = vshrl.u32 %v323, 7
    %v325 = vsub.s32 3, %v324
    %v326 = vrot.slane %v92, %v325
    %v327 = vlaneseq
    %v328 = vshrl.u32 %v327, 7
    %v329 = vsub.s32 3, %v328
    %v330 = vrot.slane %v93, %v329
    %331 = vmatprep.subr.mxu0 %v290
    %332 = vmatpush1.msra.mxu0 %v289
    %333 = vmatprep.subr.mxu0 %v288
    %334 = vmatpush1.msra.mxu0 %v287
    %335 = vmatprep.subr.mxu0 %v286
    %336 = vmatpush1.msra.mxu0 %v285
    %337 = vmatprep.subr.mxu0 %v284
    %338 = vmatpush1.msra.mxu0 %v283
    %339 = vmatprep.subr.mxu0 %v282
    %340 = vmatpush1.msra.mxu0 %v281
    %341 = vmatprep.subr.mxu0 %v280
    %342 = vmatpush1.msra.mxu0 %v279
    %343 = vmatprep.subr.mxu0 %v278
    %344 = vmatpush1.msra.mxu0 %v277
    %345 = vmatprep.subr.mxu0 %v276
    %346 = vmatpush1.msra.mxu0 %v275
    %347 = vmatprep.subr.mxu0 %v274
    %348 = vmatpush1.msra.mxu0 %v273
    %349 = vmatprep.subr.mxu0 %v272
    %350 = vmatpush1.msra.mxu0 %v271
    %351 = vmatprep.subr.mxu0 %v270
    %352 = vmatpush1.msra.mxu0 %v269
    %353 = vmatprep.subr.mxu0 %v268
    %354 = vmatpush1.msra.mxu0 %v267
    %355 = vmatprep.subr.mxu0 %v266
    %356 = vmatpush1.msra.mxu0 %v265
    %357 = vmatprep.subr.mxu0 %v264
    %358 = vmatpush1.msra.mxu0 %v263
    %359 = vmatprep.subr.mxu0 %v262
    %360 = vmatpush1.msra.mxu0 %v261
    %361 = vmatprep.subr.mxu0 %v260
    %362 = vmatpush1.msra.mxu0 %v259
    %363 = vmatprep.subr.mxu0 %v322
    %364 = vmatpush2.msra.mxu0 %v321
    %365 = vmatprep.subr.mxu0 %v320
    %366 = vmatpush2.msra.mxu0 %v319
    %367 = vmatprep.subr.mxu0 %v318
    %368 = vmatpush2.msra.mxu0 %v317
    %369 = vmatprep.subr.mxu0 %v316
    %370 = vmatpush2.msra.mxu0 %v315
    %371 = vmatprep.subr.mxu0 %v314
    %372 = vmatpush2.msra.mxu0 %v313
    %373 = vmatprep.subr.mxu0 %v312
    %374 = vmatpush2.msra.mxu0 %v311
    %375 = vmatprep.subr.mxu0 %v310
    %376 = vmatpush2.msra.mxu0 %v309
    %377 = vmatprep.subr.mxu0 %v308
    %378 = vmatpush2.msra.mxu0 %v307
    %379 = vmatprep.subr.mxu0 %v306
    %380 = vmatpush2.msra.mxu0 %v305
    %381 = vmatprep.subr.mxu0 %v304
    %382 = vmatpush2.msra.mxu0 %v303
    %383 = vmatprep.subr.mxu0 %v302
    %384 = vmatpush2.msra.mxu0 %v301
    %385 = vmatprep.subr.mxu0 %v300
    %386 = vmatpush2.msra.mxu0 %v299
    %387 = vmatprep.subr.mxu0 %v298
    %388 = vmatpush2.msra.mxu0 %v297
    %389 = vmatprep.subr.mxu0 %v296
    %390 = vmatpush2.msra.mxu0 %v295
    %391 = vmatprep.subr.mxu0 %v294
    %392 = vmatpush2.msra.mxu0 %v293
    %393 = vmatprep.subr.mxu0 %v292
    %394 = vmatpush2.msra.mxu0 %v291
    %395 = vmatprep.mubr.f32.mxu0 %v258
    %396 = vmatmul.mubr.f32.gmra.mxu0 %v257
    %v397 = vpop.f32.mrf.mxu0
    %v398 = vadd.f32 %v326, %v397
    %v399 = vpop.f32.mrf.mxu0
    %v400 = vadd.f32 %v330, %v399
    %401 = vdwg.mxu0
    %v402 = vmul.f32 %v398, %v101
    %v403 = vmul.f32 %v400, %v101
    %v404 = vrot.slane %v402, 4
    %v405 = vadd.f32 %v402, %v404
    %v406 = vrot.slane %v405, 2
    %v407 = vadd.f32 %v405, %v406
    %v408 = vrot.slane %v407, 1
    %v409 = vadd.f32 %v407, %v408
    %v410 = vrot.slane %v403, 4
    %v411 = vadd.f32 %v403, %v410
    %v412 = vrot.slane %v411, 2
    %v413 = vadd.f32 %v411, %v412
    %v414 = vrot.slane %v413, 1
    %v415 = vadd.f32 %v413, %v414
    %v416 = vmul.f32 %v402, %v398
    %v417 = vmul.f32 %v403, %v400
    %v418 = vrot.slane %v416, 4
    %v419 = vadd.f32 %v416, %v418
    %v420 = vrot.slane %v419, 2
    %v421 = vadd.f32 %v419, %v420
    %v422 = vrot.slane %v421, 1
    %v423 = vadd.f32 %v421, %v422
    %v424 = vrot.slane %v417, 4
    %v425 = vadd.f32 %v417, %v424
    %v426 = vrot.slane %v425, 2
    %v427 = vadd.f32 %v425, %v426
    %v428 = vrot.slane %v427, 1
    %v429 = vadd.f32 %v427, %v428
    %v430 = vmul.f32 %v409, 0.25
    %v431 = vmul.f32 %v415, 0.25
    %v432 = vmul.f32 %v423, 0.25
    %v433 = vmul.f32 %v429, 0.25
    %v434 = vmul.f32 %v430, %v430
    %v435 = vmul.f32 %v431, %v431
    %v436 = vsub.f32 %v432, %v434
    %v437 = vsub.f32 %v433, %v435
    %v438 = vsub.f32 %v398, %v430
    %v439 = vsub.f32 %v400, %v431
    %v440 = vadd.f32 %v436, 1e-05
    %v441 = vadd.f32 %v437, 1e-05
    %v442 = vrsqrt.pop %v440
    %v443 = vrsqrt.pop %v441
    %v444 = vmul.f32 %v438, %v442
    %v445 = vmul.f32 %v439, %v443
    %v446 = vlaneseq
    %v447 = vshrl.u32 %v446, 7
    %v448 = vsub.s32 4, %v447
    %v449 = vrot.slane %v92, %v448
    %v450 = vlaneseq
    %v451 = vshrl.u32 %v450, 7
    %v452 = vsub.s32 4, %v451
    %v453 = vrot.slane %v93, %v452
    %v454 = vmul.f32 %v444, %v449
    %v455 = vmul.f32 %v445, %v453
    %v456 = vlaneseq
    %v457 = vshrl.u32 %v456, 7
    %v458 = vsub.s32 5, %v457
    %v459 = vrot.slane %v92, %v458
    %v460 = vlaneseq
    %v461 = vshrl.u32 %v460, 7
    %v462 = vsub.s32 5, %v461
    %v463 = vrot.slane %v93, %v462
    %v464 = vadd.f32 %v454, %v459
    %v465 = vadd.f32 %v455, %v463
    %v466 = vmax.f32 %v464, 0.0
    %v467 = vmax.f32 %v465, 0.0
    %v468 = vld [vmem:[#allocation6] sm:$0xff]
    %v469 = vld [vmem:[#allocation6 + $0x8] sm:$0xff]
    %v470 = vld [vmem:[#allocation6 + $0x10] sm:$0xff]
    %v471 = vld [vmem:[#allocation6 + $0x18] sm:$0xff]
    %v472 = vld [vmem:[#allocation6 + $0x20] sm:$0xff]
    %v473 = vld [vmem:[#allocation6 + $0x28] sm:$0xff]
    %v474 = vld [vmem:[#allocation6 + $0x30] sm:$0xff]
    %v475 = vld [vmem:[#allocation6 + $0x38] sm:$0xff]
    %v476 = vld [vmem:[#allocation6 + $0x40] sm:$0xff]
    %v477 = vld [vmem:[#allocation6 + $0x48] sm:$0xff]
    %v478 = vld [vmem:[#allocation6 + $0x50] sm:$0xff]
    %v479 = vld [vmem:[#allocation6 + $0x58] sm:$0xff]
    %v480 = vld [vmem:[#allocation6 + $0x60] sm:$0xff]
    %v481 = vld [vmem:[#allocation6 + $0x68] sm:$0xff]
    %v482 = vld [vmem:[#allocation6 + $0x70] sm:$0xff]
    %v483 = vld [vmem:[#allocation6 + $0x78] sm:$0xff]
    %v484 = vld [vmem:[#allocation6 + $0x80] sm:$0xff]
    %v485 = vld [vmem:[#allocation6 + $0x88] sm:$0xff]
    %v486 = vld [vmem:[#allocation6 + $0x90] sm:$0xff]
    %v487 = vld [vmem:[#allocation6 + $0x98] sm:$0xff]
    %v488 = vld [vmem:[#allocation6 + $0xa0] sm:$0xff]
    %v489 = vld [vmem:[#allocation6 + $0xa8] sm:$0xff]
    %v490 = vld [vmem:[#allocation6 + $0xb0] sm:$0xff]
    %v491 = vld [vmem:[#allocation6 + $0xb8] sm:$0xff]
    %v492 = vld [vmem:[#allocation6 + $0xc0] sm:$0xff]
    %v493 = vld [vmem:[#allocation6 + $0xc8] sm:$0xff]
    %v494 = vld [vmem:[#allocation6 + $0xd0] sm:$0xff]
    %v495 = vld [vmem:[#allocation6 + $0xd8] sm:$0xff]
    %v496 = vld [vmem:[#allocation6 + $0xe0] sm:$0xff]
    %v497 = vld [vmem:[#allocation6 + $0xe8] sm:$0xff]
    %v498 = vld [vmem:[#allocation6 + $0xf0] sm:$0xff]
    %v499 = vld [vmem:[#allocation6 + $0xf8] sm:$0xff]
    %v500 = vld [vmem:[#allocation6 + $0x100] sm:$0xff]
    %v501 = vld [vmem:[#allocation6 + $0x108] sm:$0xff]
    %v502 = vld [vmem:[#allocation6 + $0x110] sm:$0xff]
    %v503 = vld [vmem:[#allocation6 + $0x118] sm:$0xff]
    %v504 = vld [vmem:[#allocation6 + $0x120] sm:$0xff]
    %v505 = vld [vmem:[#allocation6 + $0x128] sm:$0xff]
    %v506 = vld [vmem:[#allocation6 + $0x130] sm:$0xff]
    %v507 = vld [vmem:[#allocation6 + $0x138] sm:$0xff]
    %v508 = vld [vmem:[#allocation6 + $0x140] sm:$0xff]
    %v509 = vld [vmem:[#allocation6 + $0x148] sm:$0xff]
    %v510 = vld [vmem:[#allocation6 + $0x150] sm:$0xff]
    %v511 = vld [vmem:[#allocation6 + $0x158] sm:$0xff]
    %v512 = vld [vmem:[#allocation6 + $0x160] sm:$0xff]
    %v513 = vld [vmem:[#allocation6 + $0x168] sm:$0xff]
    %v514 = vld [vmem:[#allocation6 + $0x170] sm:$0xff]
    %v515 = vld [vmem:[#allocation6 + $0x178] sm:$0xff]
    %v516 = vld [vmem:[#allocation6 + $0x180] sm:$0xff]
    %v517 = vld [vmem:[#allocation6 + $0x188] sm:$0xff]
    %v518 = vld [vmem:[#allocation6 + $0x190] sm:$0xff]
    %v519 = vld [vmem:[#allocation6 + $0x198] sm:$0xff]
    %v520 = vld [vmem:[#allocation6 + $0x1a0] sm:$0xff]
    %v521 = vld [vmem:[#allocation6 + $0x1a8] sm:$0xff]
    %v522 = vld [vmem:[#allocation6 + $0x1b0] sm:$0xff]
    %v523 = vld [vmem:[#allocation6 + $0x1b8] sm:$0xff]
    %v524 = vld [vmem:[#allocation6 + $0x1c0] sm:$0xff]
    %v525 = vld [vmem:[#allocation6 + $0x1c8] sm:$0xff]
    %v526 = vld [vmem:[#allocation6 + $0x1d0] sm:$0xff]
    %v527 = vld [vmem:[#allocation6 + $0x1d8] sm:$0xff]
    %v528 = vld [vmem:[#allocation6 + $0x1e0] sm:$0xff]
    %v529 = vld [vmem:[#allocation6 + $0x1e8] sm:$0xff]
    %v530 = vld [vmem:[#allocation6 + $0x1f0] sm:$0xff]
    %v531 = vld [vmem:[#allocation6 + $0x1f8] sm:$0xff]
    %v532 = vlaneseq
    %v533 = vshrl.u32 %v532, 7
    %v534 = vsub.s32 6, %v533
    %v535 = vrot.slane %v92, %v534
    %v536 = vlaneseq
    %v537 = vshrl.u32 %v536, 7
    %v538 = vsub.s32 6, %v537
    %v539 = vrot.slane %v93, %v538
    %540 = vmatprep.subr.mxu0 %v499
    %541 = vmatpush1.msra.mxu0 %v498
    %542 = vmatprep.subr.mxu0 %v497
    %543 = vmatpush1.msra.mxu0 %v496
    %544 = vmatprep.subr.mxu0 %v495
    %545 = vmatpush1.msra.mxu0 %v494
    %546 = vmatprep.subr.mxu0 %v493
    %547 = vmatpush1.msra.mxu0 %v492
    %548 = vmatprep.subr.mxu0 %v491
    %549 = vmatpush1.msra.mxu0 %v490
    %550 = vmatprep.subr.mxu0 %v489
    %551 = vmatpush1.msra.mxu0 %v488
    %552 = vmatprep.subr.mxu0 %v487
    %553 = vmatpush1.msra.mxu0 %v486
    %554 = vmatprep.subr.mxu0 %v485
    %555 = vmatpush1.msra.mxu0 %v484
    %556 = vmatprep.subr.mxu0 %v483
    %557 = vmatpush1.msra.mxu0 %v482
    %558 = vmatprep.subr.mxu0 %v481
    %559 = vmatpush1.msra.mxu0 %v480
    %560 = vmatprep.subr.mxu0 %v479
    %561 = vmatpush1.msra.mxu0 %v478
    %562 = vmatprep.subr.mxu0 %v477
    %563 = vmatpush1.msra.mxu0 %v476
    %564 = vmatprep.subr.mxu0 %v475
    %565 = vmatpush1.msra.mxu0 %v474
    %566 = vmatprep.subr.mxu0 %v473
    %567 = vmatpush1.msra.mxu0 %v472
    %568 = vmatprep.subr.mxu0 %v471
    %569 = vmatpush1.msra.mxu0 %v470
    %570 = vmatprep.subr.mxu0 %v469
    %571 = vmatpush1.msra.mxu0 %v468
    %572 = vmatprep.subr.mxu0 %v531
    %573 = vmatpush2.msra.mxu0 %v530
    %574 = vmatprep.subr.mxu0 %v529
    %575 = vmatpush2.msra.mxu0 %v528
    %576 = vmatprep.subr.mxu0 %v527
    %577 = vmatpush2.msra.mxu0 %v526
    %578 = vmatprep.subr.mxu0 %v525
    %579 = vmatpush2.msra.mxu0 %v524
    %580 = vmatprep.subr.mxu0 %v523
    %581 = vmatpush2.msra.mxu0 %v522
    %582 = vmatprep.subr.mxu0 %v521
    %583 = vmatpush2.msra.mxu0 %v520
    %584 = vmatprep.subr.mxu0 %v519
    %585 = vmatpush2.msra.mxu0 %v518
    %586 = vmatprep.subr.mxu0 %v517
    %587 = vmatpush2.msra.mxu0 %v516
    %588 = vmatprep.subr.mxu0 %v515
    %589 = vmatpush2.msra.mxu0 %v514
    %590 = vmatprep.subr.mxu0 %v513
    %591 = vmatpush2.msra.mxu0 %v512
    %592 = vmatprep.subr.mxu0 %v511
    %593 = vmatpush2.msra.mxu0 %v510
    %594 = vmatprep.subr.mxu0 %v509
    %595 = vmatpush2.msra.mxu0 %v508
    %596 = vmatprep.subr.mxu0 %v507
    %597 = vmatpush2.msra.mxu0 %v506
    %598 = vmatprep.subr.mxu0 %v505
    %599 = vmatpush2.msra.mxu0 %v504
    %600 = vmatprep.subr.mxu0 %v503
    %601 = vmatpush2.msra.mxu0 %v502
    %602 = vmatprep.subr.mxu0 %v501
    %603 = vmatpush2.msra.mxu0 %v500
    %604 = vmatprep.mubr.f32.mxu0 %v467
    %605 = vmatmul.mubr.f32.gmra.mxu0 %v466
    %v606 = vpop.f32.mrf.mxu0
    %v607 = vadd.f32 %v535, %v606
    %v608 = vpop.f32.mrf.mxu0
    %v609 = vadd.f32 %v539, %v608
    %610 = vdwg.mxu0
    %v611 = vmul.f32 %v607, %v101
    %v612 = vmul.f32 %v609, %v101
    %v613 = vrot.slane %v611, 4
    %v614 = vadd.f32 %v611, %v613
    %v615 = vrot.slane %v614, 2
    %v616 = vadd.f32 %v614, %v615
    %v617 = vrot.slane %v616, 1
    %v618 = vadd.f32 %v616, %v617
    %v619 = vrot.slane %v612, 4
    %v620 = vadd.f32 %v612, %v619
    %v621 = vrot.slane %v620, 2
    %v622 = vadd.f32 %v620, %v621
    %v623 = vrot.slane %v622, 1
    %v624 = vadd.f32 %v622, %v623
    %v625 = vmul.f32 %v611, %v607
    %v626 = vmul.f32 %v612, %v609
    %v627 = vrot.slane %v625, 4
    %v628 = vadd.f32 %v625, %v627
    %v629 = vrot.slane %v628, 2
    %v630 = vadd.f32 %v628, %v629
    %v631 = vrot.slane %v630, 1
    %v632 = vadd.f32 %v630, %v631
    %v633 = vrot.slane %v626, 4
    %v634 = vadd.f32 %v626, %v633
    %v635 = vrot.slane %v634, 2
    %v636 = vadd.f32 %v634, %v635
    %v637 = vrot.slane %v636, 1
    %v638 = vadd.f32 %v636, %v637
    %v639 = vmul.f32 %v618, 0.25
    %v640 = vmul.f32 %v624, 0.25
    %v641 = vmul.f32 %v632, 0.25
    %v642 = vmul.f32 %v638, 0.25
    %v643 = vmul.f32 %v639, %v639
    %v644 = vmul.f32 %v640, %v640
    %v645 = vsub.f32 %v641, %v643
    %v646 = vsub.f32 %v642, %v644
    %v647 = vsub.f32 %v607, %v639
    %v648 = vsub.f32 %v609, %v640
    %v649 = vadd.f32 %v645, 1e-05
    %v650 = vadd.f32 %v646, 1e-05
    %v651 = vrsqrt.pop %v649
    %v652 = vrsqrt.pop %v650
    %v653 = vmul.f32 %v647, %v651
    %v654 = vmul.f32 %v648, %v652
    %v655 = vlaneseq
    %v656 = vshrl.u32 %v655, 7
    %v657 = vsub.s32 7, %v656
    %v658 = vrot.slane %v92, %v657
    %v659 = vlaneseq
    %v660 = vshrl.u32 %v659, 7
    %v661 = vsub.s32 7, %v660
    %v662 = vrot.slane %v93, %v661
    %v663 = vmul.f32 %v653, %v658
    %v664 = vmul.f32 %v654, %v662
    %v665 = vlaneseq
    %v666 = vshrl.u32 %v665, 7
    %v667 = vsub.s32 0, %v666
    %v668 = vrot.slane %v94, %v667
    %v669 = vlaneseq
    %v670 = vshrl.u32 %v669, 7
    %v671 = vsub.s32 0, %v670
    %v672 = vrot.slane %v95, %v671
    %v673 = vadd.f32 %v663, %v668
    %v674 = vadd.f32 %v664, %v672
    %675 = vrot.lane.b32.xlu0 %v91, 32
    %v676 = vpop.permute.xlu0 %675
    %678 = vrot.lane.b32.xlu0 %v91, 64
    %v679 = vpop.permute.xlu0 %678
    %681 = vrot.lane.b32.xlu0 %v91, 96
    %v682 = vpop.permute.xlu0 %681
    %v684 = vsel %vm118, %v91, %v676
    %vm685 = vcmask 523264
    %v686 = vsel %vm685, %v684, %v679
    %vm687 = vcmask 785408
    %v688 = vsel %vm687, %v686, %v682
    %v689 = vsel %vm687, %v686, 0.0
    %v690 = vadd.f32 %v673, %v688
    %v691 = vadd.f32 %v674, %v689
    %v692 = vmax.f32 %v690, 0.0
    %v693 = vmax.f32 %v691, 0.0
    %v694 = vld [vmem:[#allocation7] sm:$0xff]
    %v695 = vld [vmem:[#allocation7 + $0x8] sm:$0xff]
    %v696 = vld [vmem:[#allocation7 + $0x10] sm:$0xff]
    %v697 = vld [vmem:[#allocation7 + $0x18] sm:$0xff]
    %v698 = vld [vmem:[#allocation7 + $0x20] sm:$0xff]
    %v699 = vld [vmem:[#allocation7 + $0x28] sm:$0xff]
    %v700 = vld [vmem:[#allocation7 + $0x30] sm:$0xff]
    %v701 = vld [vmem:[#allocation7 + $0x38] sm:$0xff]
    %v702 = vld [vmem:[#allocation7 + $0x40] sm:$0xff]
    %v703 = vld [vmem:[#allocation7 + $0x48] sm:$0xff]
    %v704 = vld [vmem:[#allocation7 + $0x50] sm:$0xff]
    %v705 = vld [vmem:[#allocation7 + $0x58] sm:$0xff]
    %v706 = vld [vmem:[#allocation7 + $0x60] sm:$0xff]
    %v707 = vld [vmem:[#allocation7 + $0x68] sm:$0xff]
    %v708 = vld [vmem:[#allocation7 + $0x70] sm:$0xff]
    %v709 = vld [vmem:[#allocation7 + $0x78] sm:$0xff]
    %v710 = vld [vmem:[#allocation7 + $0x80] sm:$0xff]
    %v711 = vld [vmem:[#allocation7 + $0x88] sm:$0xff]
    %v712 = vld [vmem:[#allocation7 + $0x90] sm:$0xff]
    %v713 = vld [vmem:[#allocation7 + $0x98] sm:$0xff]
    %v714 = vld [vmem:[#allocation7 + $0xa0] sm:$0xff]
    %v715 = vld [vmem:[#allocation7 + $0xa8] sm:$0xff]
    %v716 = vld [vmem:[#allocation7 + $0xb0] sm:$0xff]
    %v717 = vld [vmem:[#allocation7 + $0xb8] sm:$0xff]
    %v718 = vld [vmem:[#allocation7 + $0xc0] sm:$0xff]
    %v719 = vld [vmem:[#allocation7 + $0xc8] sm:$0xff]
    %v720 = vld [vmem:[#allocation7 + $0xd0] sm:$0xff]
    %v721 = vld [vmem:[#allocation7 + $0xd8] sm:$0xff]
    %v722 = vld [vmem:[#allocation7 + $0xe0] sm:$0xff]
    %v723 = vld [vmem:[#allocation7 + $0xe8] sm:$0xff]
    %v724 = vld [vmem:[#allocation7 + $0xf0] sm:$0xff]
    %v725 = vld [vmem:[#allocation7 + $0xf8] sm:$0xff]
    %v726 = vld [vmem:[#allocation7 + $0x100] sm:$0xff]
    %v727 = vld [vmem:[#allocation7 + $0x108] sm:$0xff]
    %v728 = vld [vmem:[#allocation7 + $0x110] sm:$0xff]
    %v729 = vld [vmem:[#allocation7 + $0x118] sm:$0xff]
    %v730 = vld [vmem:[#allocation7 + $0x120] sm:$0xff]
    %v731 = vld [vmem:[#allocation7 + $0x128] sm:$0xff]
    %v732 = vld [vmem:[#allocation7 + $0x130] sm:$0xff]
    %v733 = vld [vmem:[#allocation7 + $0x138] sm:$0xff]
    %v734 = vld [vmem:[#allocation7 + $0x140] sm:$0xff]
    %v735 = vld [vmem:[#allocation7 + $0x148] sm:$0xff]
    %v736 = vld [vmem:[#allocation7 + $0x150] sm:$0xff]
    %v737 = vld [vmem:[#allocation7 + $0x158] sm:$0xff]
    %v738 = vld [vmem:[#allocation7 + $0x160] sm:$0xff]
    %v739 = vld [vmem:[#allocation7 + $0x168] sm:$0xff]
    %v740 = vld [vmem:[#allocation7 + $0x170] sm:$0xff]
    %v741 = vld [vmem:[#allocation7 + $0x178] sm:$0xff]
    %v742 = vld [vmem:[#allocation7 + $0x180] sm:$0xff]
    %v743 = vld [vmem:[#allocation7 + $0x188] sm:$0xff]
    %v744 = vld [vmem:[#allocation7 + $0x190] sm:$0xff]
    %v745 = vld [vmem:[#allocation7 + $0x198] sm:$0xff]
    %v746 = vld [vmem:[#allocation7 + $0x1a0] sm:$0xff]
    %v747 = vld [vmem:[#allocation7 + $0x1a8] sm:$0xff]
    %v748 = vld [vmem:[#allocation7 + $0x1b0] sm:$0xff]
    %v749 = vld [vmem:[#allocation7 + $0x1b8] sm:$0xff]
    %v750 = vld [vmem:[#allocation7 + $0x1c0] sm:$0xff]
    %v751 = vld [vmem:[#allocation7 + $0x1c8] sm:$0xff]
    %v752 = vld [vmem:[#allocation7 + $0x1d0] sm:$0xff]
    %v753 = vld [vmem:[#allocation7 + $0x1d8] sm:$0xff]
    %v754 = vld [vmem:[#allocation7 + $0x1e0] sm:$0xff]
    %v755 = vld [vmem:[#allocation7 + $0x1e8] sm:$0xff]
    %v756 = vld [vmem:[#allocation7 + $0x1f0] sm:$0xff]
    %v757 = vld [vmem:[#allocation7 + $0x1f8] sm:$0xff]
    %v758 = vld [vmem:[#allocation7 + $0x200] sm:$0xff]
    %v759 = vld [vmem:[#allocation7 + $0x208] sm:$0xff]
    %v760 = vld [vmem:[#allocation7 + $0x210] sm:$0xff]
    %v761 = vld [vmem:[#allocation7 + $0x218] sm:$0xff]
    %v762 = vld [vmem:[#allocation7 + $0x220] sm:$0xff]
    %v763 = vld [vmem:[#allocation7 + $0x228] sm:$0xff]
    %v764 = vld [vmem:[#allocation7 + $0x230] sm:$0xff]
    %v765 = vld [vmem:[#allocation7 + $0x238] sm:$0xff]
    %v766 = vld [vmem:[#allocation7 + $0x240] sm:$0xff]
    %v767 = vld [vmem:[#allocation7 + $0x248] sm:$0xff]
    %v768 = vld [vmem:[#allocation7 + $0x250] sm:$0xff]
    %v769 = vld [vmem:[#allocation7 + $0x258] sm:$0xff]
    %v770 = vld [vmem:[#allocation7 + $0x260] sm:$0xff]
    %v771 = vld [vmem:[#allocation7 + $0x268] sm:$0xff]
    %v772 = vld [vmem:[#allocation7 + $0x270] sm:$0xff]
    %v773 = vld [vmem:[#allocation7 + $0x278] sm:$0xff]
    %v774 = vld [vmem:[#allocation7 + $0x280] sm:$0xff]
    %v775 = vld [vmem:[#allocation7 + $0x288] sm:$0xff]
    %v776 = vld [vmem:[#allocation7 + $0x290] sm:$0xff]
    %v777 = vld [vmem:[#allocation7 + $0x298] sm:$0xff]
    %v778 = vld [vmem:[#allocation7 + $0x2a0] sm:$0xff]
    %v779 = vld [vmem:[#allocation7 + $0x2a8] sm:$0xff]
    %v780 = vld [vmem:[#allocation7 + $0x2b0] sm:$0xff]
    %v781 = vld [vmem:[#allocation7 + $0x2b8] sm:$0xff]
    %v782 = vld [vmem:[#allocation7 + $0x2c0] sm:$0xff]
    %v783 = vld [vmem:[#allocation7 + $0x2c8] sm:$0xff]
    %v784 = vld [vmem:[#allocation7 + $0x2d0] sm:$0xff]
    %v785 = vld [vmem:[#allocation7 + $0x2d8] sm:$0xff]
    %v786 = vld [vmem:[#allocation7 + $0x2e0] sm:$0xff]
    %v787 = vld [vmem:[#allocation7 + $0x2e8] sm:$0xff]
    %v788 = vld [vmem:[#allocation7 + $0x2f0] sm:$0xff]
    %v789 = vld [vmem:[#allocation7 + $0x2f8] sm:$0xff]
    %v790 = vlaneseq
    %v791 = vshrl.u32 %v790, 7
    %v792 = vsub.s32 1, %v791
    %v793 = vrot.slane %v94, %v792
    %v794 = vlaneseq
    %v795 = vshrl.u32 %v794, 7
    %v796 = vsub.s32 1, %v795
    %v797 = vrot.slane %v95, %v796
    %v798 = vlaneseq
    %v799 = vshrl.u32 %v798, 7
    %v800 = vsub.s32 1, %v799
    %v801 = vrot.slane %v96, %v800
    %802 = vmatprep.subr.mxu0 %v740
    %803 = vmatpush1.msra.mxu0 %v739
    %804 = vmatprep.subr.mxu0 %v737
    %805 = vmatpush1.msra.mxu0 %v736
    %806 = vmatprep.subr.mxu0 %v734
    %807 = vmatpush1.msra.mxu0 %v733
    %808 = vmatprep.subr.mxu0 %v731
    %809 = vmatpush1.msra.mxu0 %v730
    %810 = vmatprep.subr.mxu0 %v728
    %811 = vmatpush1.msra.mxu0 %v727
    %812 = vmatprep.subr.mxu0 %v725
    %813 = vmatpush1.msra.mxu0 %v724
    %814 = vmatprep.subr.mxu0 %v722
    %815 = vmatpush1.msra.mxu0 %v721
    %816 = vmatprep.subr.mxu0 %v719
    %817 = vmatpush1.msra.mxu0 %v718
    %818 = vmatprep.subr.mxu0 %v716
    %819 = vmatpush1.msra.mxu0 %v715
    %820 = vmatprep.subr.mxu0 %v713
    %821 = vmatpush1.msra.mxu0 %v712
    %822 = vmatprep.subr.mxu0 %v710
    %823 = vmatpush1.msra.mxu0 %v709
    %824 = vmatprep.subr.mxu0 %v707
    %825 = vmatpush1.msra.mxu0 %v706
    %826 = vmatprep.subr.mxu0 %v704
    %827 = vmatpush1.msra.mxu0 %v703
    %828 = vmatprep.subr.mxu0 %v701
    %829 = vmatpush1.msra.mxu0 %v700
    %830 = vmatprep.subr.mxu0 %v698
    %831 = vmatpush1.msra.mxu0 %v697
    %832 = vmatprep.subr.mxu0 %v695
    %833 = vmatpush1.msra.mxu0 %v694
    %834 = vmatprep.subr.mxu0 %v788
    %835 = vmatpush2.msra.mxu0 %v787
    %836 = vmatprep.subr.mxu0 %v785
    %837 = vmatpush2.msra.mxu0 %v784
    %838 = vmatprep.subr.mxu0 %v782
    %839 = vmatpush2.msra.mxu0 %v781
    %840 = vmatprep.subr.mxu0 %v779
    %841 = vmatpush2.msra.mxu0 %v778
    %842 = vmatprep.subr.mxu0 %v776
    %843 = vmatpush2.msra.mxu0 %v775
    %844 = vmatprep.subr.mxu0 %v773
    %845 = vmatpush2.msra.mxu0 %v772
    %846 = vmatprep.subr.mxu0 %v770
    %847 = vmatpush2.msra.mxu0 %v769
    %848 = vmatprep.subr.mxu0 %v767
    %849 = vmatpush2.msra.mxu0 %v766
    %850 = vmatprep.subr.mxu0 %v764
    %851 = vmatpush2.msra.mxu0 %v763
    %852 = vmatprep.subr.mxu0 %v761
    %853 = vmatpush2.msra.mxu0 %v760
    %854 = vmatprep.subr.mxu0 %v758
    %855 = vmatpush2.msra.mxu0 %v757
    %856 = vmatprep.subr.mxu0 %v755
    %857 = vmatpush2.msra.mxu0 %v754
    %858 = vmatprep.subr.mxu0 %v752
    %859 = vmatpush2.msra.mxu0 %v751
    %860 = vmatprep.subr.mxu0 %v749
    %861 = vmatpush2.msra.mxu0 %v748
    %862 = vmatprep.subr.mxu0 %v746
    %863 = vmatpush2.msra.mxu0 %v745
    %864 = vmatprep.subr.mxu0 %v743
    %865 = vmatpush2.msra.mxu0 %v742
    %866 = vmatprep.mubr.f32.mxu0 %v693
    %867 = vmatmul.mubr.f32.gmra.mxu0 %v692
    %v868 = vpop.f32.mrf.mxu0
    %v869 = vadd.f32 %v793, %v868
    %v870 = vpop.f32.mrf.mxu0
    %v871 = vadd.f32 %v797, %v870
    %872 = vdwg.mxu0
    %873 = vmatprep.subr.mxu0 0.0
    %874 = vmatpush1.msra.mxu0 %v741
    %875 = vmatprep.subr.mxu0 0.0
    %876 = vmatpush1.msra.mxu0 %v738
    %877 = vmatprep.subr.mxu0 0.0
    %878 = vmatpush1.msra.mxu0 %v735
    %879 = vmatprep.subr.mxu0 0.0
    %880 = vmatpush1.msra.mxu0 %v732
    %881 = vmatprep.subr.mxu0 0.0
    %882 = vmatpush1.msra.mxu0 %v729
    %883 = vmatprep.subr.mxu0 0.0
    %884 = vmatpush1.msra.mxu0 %v726
    %885 = vmatprep.subr.mxu0 0.0
    %886 = vmatpush1.msra.mxu0 %v723
    %887 = vmatprep.subr.mxu0 0.0
    %888 = vmatpush1.msra.mxu0 %v720
    %889 = vmatprep.subr.mxu0 0.0
    %890 = vmatpush1.msra.mxu0 %v717
    %891 = vmatprep.subr.mxu0 0.0
    %892 = vmatpush1.msra.mxu0 %v714
    %893 = vmatprep.subr.mxu0 0.0
    %894 = vmatpush1.msra.mxu0 %v711
    %895 = vmatprep.subr.mxu0 0.0
    %896 = vmatpush1.msra.mxu0 %v708
    %897 = vmatprep.subr.mxu0 0.0
    %898 = vmatpush1.msra.mxu0 %v705
    %899 = vmatprep.subr.mxu0 0.0
    %900 = vmatpush1.msra.mxu0 %v702
    %901 = vmatprep.subr.mxu0 0.0
    %902 = vmatpush1.msra.mxu0 %v699
    %903 = vmatprep.subr.mxu0 0.0
    %904 = vmatpush1.msra.mxu0 %v696
    %905 = vmatprep.subr.mxu0 0.0
    %906 = vmatpush2.msra.mxu0 %v789
    %907 = vmatprep.subr.mxu0 0.0
    %908 = vmatpush2.msra.mxu0 %v786
    %909 = vmatprep.subr.mxu0 0.0
    %910 = vmatpush2.msra.mxu0 %v783
    %911 = vmatprep.subr.mxu0 0.0
    %912 = vmatpush2.msra.mxu0 %v780
    %913 = vmatprep.subr.mxu0 0.0
    %914 = vmatpush2.msra.mxu0 %v777
    %915 = vmatprep.subr.mxu0 0.0
    %916 = vmatpush2.msra.mxu0 %v774
    %917 = vmatprep.subr.mxu0 0.0
    %918 = vmatpush2.msra.mxu0 %v771
    %919 = vmatprep.subr.mxu0 0.0
    %920 = vmatpush2.msra.mxu0 %v768
    %921 = vmatprep.subr.mxu0 0.0
    %922 = vmatpush2.msra.mxu0 %v765
    %923 = vmatprep.subr.mxu0 0.0
    %924 = vmatpush2.msra.mxu0 %v762
    %925 = vmatprep.subr.mxu0 0.0
    %926 = vmatpush2.msra.mxu0 %v759
    %927 = vmatprep.subr.mxu0 0.0
    %928 = vmatpush2.msra.mxu0 %v756
    %929 = vmatprep.subr.mxu0 0.0
    %930 = vmatpush2.msra.mxu0 %v753
    %931 = vmatprep.subr.mxu0 0.0
    %932 = vmatpush2.msra.mxu0 %v750
    %933 = vmatprep.subr.mxu0 0.0
    %934 = vmatpush2.msra.mxu0 %v747
    %935 = vmatprep.subr.mxu0 0.0
    %936 = vmatpush2.msra.mxu0 %v744
    %937 = vmatprep.mubr.f32.mxu0 %v693
    %938 = vmatmul.mubr.f32.gmra.mxu0 %v692
    %v939 = vpop.f32.mrf.mxu0
    %v940 = vadd.f32 %v801, %v939
    %v941 = vpop.f32.mrf.mxu0
    %942 = vdwg.mxu0
    %v943 = vlaneseq
    %v944 = vand.u32 %v943, 127
    %vm945 = vcmp.ge.s32.totalorder %v944, 104
    %vm946 = vcmp.lt.s32.totalorder %v944, 110
    %vm947 = vmand %vm945, %vm946
    %v948 = vsel %vm947, %v940, -inf
    %949 = vmax.xlane.f32.xlu0 %v948
    %v950 = vpop.xlane.xlu0 %949
    %v951 = vsub.f32 %v948, %v950
    %v952 = vmul.f32 %v951, 1.442695
    %v953 = vpow.pop %v952
    %954 = vadd.xlane.f32.xlu0 %v953
    %v955 = vpop.xlane.xlu0 %954
    %v956 = vrcp.pop %v955
    %v957 = vmul.f32 %v953, %v956
    %v958 = vsel %vm947, %v957, %v940
    %959 = vst [vmem:[%s6] sm:$0xff] %v869
    %960 = vst [vmem:[%s6 + $0x8] sm:$0xff] %v871
    %961 = vst [vmem:[%s6 + $0x10] sm:$0xff] %v958
    // Predicated region
    $region46: #{multimodal_decoder_pallas.1} parent=1 // pred_check
      _
    $region47: #{multimodal_decoder_pallas.1} parent=1 // pred_check_branch
      %963 = sbr.rel (0) target = $region49
    $region48: #{multimodal_decoder_pallas.1} parent=1 // pred_region
      _
    $region49: #{multimodal_decoder_pallas.1} parent=1 // pred_fallthru
      _
    // Predicated region
    $region50: #{multimodal_decoder_pallas.1} parent=1 // pred_check
      _
    $region51: #{multimodal_decoder_pallas.1} parent=1 // pred_check_branch
      %965 = sbr.rel (0) target = $region53
    $region52: #{multimodal_decoder_pallas.1} parent=1 // pred_region
      _
    $region53: #{multimodal_decoder_pallas.1} parent=1 // pred_fallthru
      _
    %966 = vsyncpa [#allocation3], 1
    %967 = vsyncpa [#allocation5], 1
    %968 = vsyncpa [#allocation8], 1

</llo_original>
